<compile_context>
chip_gen: v7x
topology: tpu7x:2x2x1
jax: 0.10.0
libtpu: 0.0.40
codegen_flags: <defaults>
</compile_context>

<pallas_src>
import functools

import jax
import jax.numpy as jnp
from jax.experimental import pallas as pl
from jax.experimental.pallas import tpu as pltpu


def _round_up(v, m):
    return (v + m - 1) // m * m


def _conv_relu_stats_kernel(x_ref, w_ref, b_ref, act_ref, stats_ref,
                            sum_sc, sq_sc, *,
                            kernel_size, dilation, l_conv, l_tile,
                            tiles_per_grp, use_slab):
    """One (batch, group, L-tile) step: conv -> bias -> ReLU -> bf16 act + stats."""
    g = pl.program_id(1)
    t = pl.program_id(2)

    xw = x_ref[0, 0]                       # (C_in, L_TILE + halo_pad), matmul dtype

    if use_slab:
        # Small C_in: fold K taps into one contraction so the MXU stays filled.
        taps = [xw[:, k * dilation:k * dilation + l_tile] for k in range(kernel_size)]
        slab = jnp.concatenate(taps, axis=0) if kernel_size > 1 else taps[0]
        acc = jnp.dot(w_ref[...], slab, preferred_element_type=jnp.float32)
    else:
        # Large C_in: K accumulated dots, no sublane concat / extra slab buffer.
        acc = jnp.dot(w_ref[0], xw[:, 0:l_tile], preferred_element_type=jnp.float32)
        for k in range(1, kernel_size):
            acc = acc + jnp.dot(w_ref[k],
                                xw[:, k * dilation:k * dilation + l_tile],
                                preferred_element_type=jnp.float32)

    acc = acc + b_ref[...]                 # (C_out, 1) bias broadcast
    act = jnp.maximum(acc, 0.0)            # ReLU in f32
    act_ref[0] = act.astype(act_ref.dtype)

    # Streaming BatchNorm statistics, accumulated in VMEM scratch (f32).
    @pl.when(t == 0)
    def _():
        sum_sc[...] = jnp.zeros_like(sum_sc)
        sq_sc[...] = jnp.zeros_like(sq_sc)

    tile_start = (g * tiles_per_grp + t) * l_tile

    @pl.when(tile_start + l_tile <= l_conv)
    def _():   # fully-valid tile: no iota/compare/select work
        sum_sc[...] += jnp.sum(act, axis=1, keepdims=True)
        sq_sc[...] += jnp.sum(act * act, axis=1, keepdims=True)

    @pl.when(tile_start + l_tile > l_conv)
    def _():   # tail tile: mask out zero-padded lanes
        pos = tile_start + jax.lax.broadcasted_iota(jnp.int32, act.shape, 1)
        masked = jnp.where(pos < l_conv, act, 0.0)
        sum_sc[...] += jnp.sum(masked, axis=1, keepdims=True)
        sq_sc[...] += jnp.sum(masked * masked, axis=1, keepdims=True)

    @pl.when(t == tiles_per_grp - 1)
    def _():   # single HBM store of the per-(batch, group) stats
        stats_ref[0, 0] = jnp.concatenate([sum_sc[...], sq_sc[...]], axis=1)


def _affine_kernel(act_ref, scale_ref, shift_ref, o_ref):
    """Fused BatchNorm normalize: out = act * scale + shift (per channel)."""
    a = act_ref[0].astype(jnp.float32)
    o_ref[0] = (a * scale_ref[...] + shift_ref[...]).astype(o_ref.dtype)


def tdnn_block(x, w, bias, gamma, beta, *, kernel_size, dilation, eps=1e-5,
               l_tile=1024, matmul_dtype=jnp.bfloat16, act_dtype=jnp.bfloat16,
               out_dtype=None):
    """x: (B, C_in, L) ; w: (C_out, C_in, K) ; bias/gamma/beta: (C_out,)."""
    B, c_in, l_in = x.shape
    c_out = w.shape[0]
    k = kernel_size
    out_dtype = x.dtype if out_dtype is None else out_dtype

    # --- 'same' padding per get_padding_elem (stride == 1), reflect mode ---
    halo = dilation * (k - 1)
    pad = halo // 2
    if pad >= l_in:
        raise ValueError("reflect 'same' padding needs dilation*(kernel_size-1)//2 < L_in")
    l_conv = l_in + 2 * pad - halo                # true conv output length
    if l_conv <= 0:
        raise ValueError("sequence too short for this kernel_size/dilation")

    # Sublane-friendly channel padding (cheap).  Full 128/256 MXU padding only
    # pays off for near-multiple channel counts, so it is left to callers.
    c_in_pad = _round_up(c_in, 8)
    c_out_pad = _round_up(c_out, 8)

    halo_pad = 0 if halo == 0 else 128            # lane-aligned halo extension

    # Lane-dense L tiling, auto-shrunk to a conservative cross-generation VMEM
    # budget (v7x has only 64 MiB physical VMEM; v5e/v6e have 128 MiB).
    l_tile = min(_round_up(l_tile, 128), _round_up(l_conv, 128))
    if halo >= l_tile:
        raise ValueError("dilation*(kernel_size-1) must be smaller than the L tile")
    mm_bytes = jnp.dtype(matmul_dtype).itemsize
    act_bytes = jnp.dtype(act_dtype).itemsize
    out_bytes = jnp.dtype(out_dtype).itemsize
    w_vmem = k * c_in_pad * c_out_pad * mm_bytes

    def _step_vmem(lt):
        return (2 * c_in_pad * (lt + halo_pad) * mm_bytes   # x window (double buffered)
                + 2 * c_out_pad * lt * act_bytes            # act tile
                + 2 * c_out_pad * lt * out_bytes            # affine output tile
                + c_out_pad * lt * 4)                       # f32 conv accumulator

    vmem_budget = 40 * 1024 * 1024
    while (_step_vmem(l_tile) + w_vmem > vmem_budget and l_tile > 128
           and _round_up(l_tile // 2, 128) > halo):
        l_tile = _round_up(l_tile // 2, 128)

    n_l = pl.cdiv(l_conv, l_tile)
    # Megacore (v7x): guarantee >= 2 units of 'parallel' work even when B == 1 by
    # splitting the L tiles into independent groups with their own partial stats.
    l_split = 2 if (B == 1 and n_l >= 2) else 1
    tpg = pl.cdiv(n_l, l_split)
    n_l_pad = tpg * l_split
    l_out_pad = n_l_pad * l_tile
    l_ext = l_tile + halo_pad
    l_total = l_out_pad + halo_pad

    # Pad channels, reflect-pad the length, zero-extend, and pre-build lane-dense
    # overlapping windows (halo folded in) -> one clean DMA per grid step.
    x_p = jnp.pad(x, ((0, 0), (0, c_in_pad - c_in), (0, 0)))
    x_p = jnp.pad(x_p, ((0, 0), (0, 0), (pad, pad)), mode="reflect")
    x_ext = jnp.pad(x_p, ((0, 0), (0, 0), (0, l_total - x_p.shape[-1]))).astype(matmul_dtype)
    if halo_pad == 0:
        x_win = x_ext.reshape(B, c_in_pad, n_l_pad, l_tile).transpose(0, 2, 1, 3)
    else:
        idx = (jnp.arange(n_l_pad) * l_tile)[:, None] + jnp.arange(l_ext)[None, :]
        x_win = jnp.transpose(x_ext[:, :, idx], (0, 2, 1, 3))  # (B, n_l_pad, C_in, l_ext)

    # Weight layout depends on the conv strategy chosen above.
    w_p = jnp.pad(w, ((0, c_out_pad - c_out), (0, c_in_pad - c_in), (0, 0)))
    use_slab = c_in_pad < 128          # small contraction -> im2col slab, else K dots
    if use_slab:
        w_mx = jnp.transpose(w_p, (0, 2, 1)).reshape(c_out_pad, k * c_in_pad).astype(matmul_dtype)
        w_spec = pl.BlockSpec((c_out_pad, k * c_in_pad), lambda b, g, t: (0, 0))
    else:
        w_mx = jnp.transpose(w_p, (2, 0, 1)).astype(matmul_dtype)   # (K, C_out, C_in)
        w_spec = pl.BlockSpec((k, c_out_pad, c_in_pad), lambda b, g, t: (0, 0, 0))
    bias_p = jnp.pad(bias, (0, c_out_pad - c_out)).reshape(c_out_pad, 1).astype(jnp.float32)

    vmem_lim = int(max(_step_vmem(l_tile) + w_vmem + (4 << 20), 48 << 20))

    conv_cost = pl.CostEstimate(
        flops=2 * B * c_out_pad * k * c_in_pad * l_out_pad,
        transcendentals=0,
        bytes_accessed=int(B * n_l_pad * c_in_pad * l_ext * mm_bytes
                           + k * c_in_pad * c_out_pad * mm_bytes
                           + B * c_out_pad * l_out_pad * act_bytes
                           + B * l_split * c_out_pad * 2 * 4))

    kernel1 = functools.partial(
        _conv_relu_stats_kernel, kernel_size=k, dilation=dilation,
        l_conv=l_conv, l_tile=l_tile, tiles_per_grp=tpg, use_slab=use_slab)

    act, stats = pl.pallas_call(
        kernel1,
        grid=(B, l_split, tpg),
        in_specs=[
            pl.BlockSpec((1, 1, c_in_pad, l_ext), lambda b, g, t: (b, g * tpg + t, 0, 0)),
            w_spec,
            pl.BlockSpec((c_out_pad, 1), lambda b, g, t: (0, 0)),
        ],
        out_specs=[
            pl.BlockSpec((1, c_out_pad, l_tile), lambda b, g, t: (b, 0, g * tpg + t)),
            pl.BlockSpec((1, 1, c_out_pad, 2), lambda b, g, t: (b, g, 0, 0)),
        ],
        out_shape=[
            jax.ShapeDtypeStruct((B, c_out_pad, l_out_pad), act_dtype),     # bf16 seam
            jax.ShapeDtypeStruct((B, l_split, c_out_pad, 2), jnp.float32),  # partial stats
        ],
        scratch_shapes=[pltpu.VMEM((c_out_pad, 1), jnp.float32),   # running sum
                        pltpu.VMEM((c_out_pad, 1), jnp.float32)],  # running sum of squares
        compiler_params=pltpu.CompilerParams(
            dimension_semantics=("parallel", "parallel", "arbitrary"),
            vmem_limit_bytes=vmem_lim),
        cost_estimate=conv_cost,
    )(x_win, w_mx, bias_p)

    # BatchNorm1d training-mode batch statistics (biased variance) -> scale/shift.
    tot = jnp.sum(stats, axis=(0, 1))                  # (C_out, 2)
    n = float(B * l_conv)
    gamma_p = jnp.pad(gamma.astype(jnp.float32), (0, c_out_pad - c_out))
    beta_p = jnp.pad(beta.astype(jnp.float32), (0, c_out_pad - c_out))
    mean = tot[:, 0] / n
    var = jnp.maximum(tot[:, 1] / n - mean * mean, 0.0)
    inv = jax.lax.rsqrt(var + eps)
    scale = (gamma_p * inv).reshape(c_out_pad, 1)
    shift = (beta_p - mean * gamma_p * inv).reshape(c_out_pad, 1)

    norm_cost = pl.CostEstimate(
        flops=2 * B * c_out_pad * l_out_pad,
        transcendentals=0,
        bytes_accessed=int(B * c_out_pad * l_out_pad * (act_bytes + out_bytes)))

    # Deeper buffering on the streaming act read (graceful fallback on older jax).
    try:
        act_in_spec = pl.BlockSpec((1, c_out_pad, l_tile), lambda b, l: (b, 0, l),
                                   pipeline_mode=pl.Buffered(3))
    except TypeError:
        act_in_spec = pl.BlockSpec((1, c_out_pad, l_tile), lambda b, l: (b, 0, l))

    out = pl.pallas_call(
        _affine_kernel,
        grid=(B, n_l_pad),
        in_specs=[
            act_in_spec,
            pl.BlockSpec((c_out_pad, 1), lambda b, l: (0, 0)),
            pl.BlockSpec((c_out_pad, 1), lambda b, l: (0, 0)),
        ],
        out_specs=pl.BlockSpec((1, c_out_pad, l_tile), lambda b, l: (b, 0, l)),
        out_shape=jax.ShapeDtypeStruct((B, c_out_pad, l_out_pad), out_dtype),
        input_output_aliases=({0: 0} if jnp.dtype(act_dtype) == jnp.dtype(out_dtype) else {}),
        compiler_params=pltpu.CompilerParams(
            dimension_semantics=("parallel", "parallel"),
            vmem_limit_bytes=vmem_lim),
        cost_estimate=norm_cost,
    )(act, scale, shift)

    # TODO(synk): BatchNorm1d running_mean/var momentum update (module training
    # state) is not modeled; the training-mode forward output does not use it.
    return out[:, :c_out, :l_conv]


if __name__ == "__main__":
    # TDNNBlock(in_channels=4, out_channels=8, kernel_size=3, dilation=2)
    B, C_in, C_out, L, K, D = 2, 4, 8, 16, 3, 2

    key = jax.random.PRNGKey(0)
    kx, kw, kb = jax.random.split(key, 3)

    x = jax.random.normal(kx, (B, C_in, L), dtype=jnp.float32)
    w = jax.random.normal(kw, (C_out, C_in, K), dtype=jnp.float32) * 0.1
    bias = jax.random.normal(kb, (C_out,), dtype=jnp.float32) * 0.1
    gamma = jnp.ones((C_out,), dtype=jnp.float32)   # BatchNorm weight init
    beta = jnp.zeros((C_out,), dtype=jnp.float32)   # BatchNorm bias init

    out = tdnn_block(x, w, bias, gamma, beta, kernel_size=K, dilation=D)
    jax.block_until_ready(out)
    assert out.shape == (B, C_out, L)
    print("KERNEL_OK")
</pallas_src>

<mosaic_0001>
module attributes {stable_mosaic.version = 11 : i64} {
  func.func @_conv_relu_stats_kernel(%arg0: i32, %arg1: i32, %arg2: i32, %arg3: memref<1x1x8x256xbf16, #tpu.memory_space<vmem>>, %arg4: memref<8x24xbf16, #tpu.memory_space<vmem>>, %arg5: memref<8x1xf32, #tpu.memory_space<vmem>>, %arg6: memref<1x8x128xbf16, #tpu.memory_space<vmem>>, %arg7: memref<1x1x8x2xf32, #tpu.memory_space<vmem>>, %arg8: memref<8x1xf32, #tpu.memory_space<vmem>>, %arg9: memref<8x1xf32, #tpu.memory_space<vmem>>) attributes {dimension_semantics = [#tpu.dimension_semantics<parallel>, #tpu.dimension_semantics<parallel>, #tpu.dimension_semantics<arbitrary>], iteration_bounds = array<i64: 2, 1, 1>, scalar_prefetch = 0 : i64, scratch_operands = 2 : i64, tpu.core_type = #tpu.core_type<tc>, window_params = [{transform_indices = @transform_0, window_bounds = array<i64: 1, 1, 8, 256>}, {pipeline_mode = #tpu.pipeline_mode<synchronous>, transform_indices = @transform_1, window_bounds = array<i64: 8, 24>}, {pipeline_mode = #tpu.pipeline_mode<synchronous>, transform_indices = @transform_2, window_bounds = array<i64: 8, 1>}, {transform_indices = @transform_3, window_bounds = array<i64: 1, 8, 128>}, {transform_indices = @transform_4, window_bounds = array<i64: 1, 1, 8, 2>}]} {
    %c0 = arith.constant 0 : index
    %c0_0 = arith.constant 0 : index
    %c0_1 = arith.constant 0 : index
    %c0_2 = arith.constant 0 : index
    %0 = vector.load %arg3[%c0, %c0_0, %c0_1, %c0_2] : memref<1x1x8x256xbf16, #tpu.memory_space<vmem>>, vector<1x1x8x256xbf16>
    %1 = vector.shape_cast %0 : vector<1x1x8x256xbf16> to vector<8x256xbf16>
    %2 = vector.extract_strided_slice %1 {offsets = [0, 0], sizes = [8, 128], strides = [1, 1]} : vector<8x256xbf16> to vector<8x128xbf16>
    %3 = vector.extract_strided_slice %1 {offsets = [0, 2], sizes = [8, 128], strides = [1, 1]} : vector<8x256xbf16> to vector<8x128xbf16>
    %4 = vector.extract_strided_slice %1 {offsets = [0, 4], sizes = [8, 128], strides = [1, 1]} : vector<8x256xbf16> to vector<8x128xbf16>
    %5 = tpu.concatenate %2, %3, %4 in 0 : vector<8x128xbf16>, vector<8x128xbf16>, vector<8x128xbf16> -> vector<24x128xbf16>
    %c0_3 = arith.constant 0 : index
    %c0_4 = arith.constant 0 : index
    %6 = vector.load %arg4[%c0_3, %c0_4] : memref<8x24xbf16, #tpu.memory_space<vmem>>, vector<8x24xbf16>
    %cst = arith.constant dense<0.000000e+00> : vector<8x128xf32>
    %7 = tpu.matmul %6, %5, %cst {dimension_numbers = #tpu.dot_dimension_numbers<[1], [0], [0], [1], [0, 0, 1, 1], [], []>} : vector<8x24xbf16>, vector<24x128xbf16>, vector<8x128xf32> -> vector<8x128xf32>
    %c0_5 = arith.constant 0 : index
    %c0_6 = arith.constant 0 : index
    %8 = vector.load %arg5[%c0_5, %c0_6] : memref<8x1xf32, #tpu.memory_space<vmem>>, vector<8x1xf32>
    %9 = vector.broadcast %8 : vector<8x1xf32> to vector<8x128xf32>
    %10 = arith.addf %7, %9 : vector<8x128xf32>
    %cst_7 = arith.constant 0.000000e+00 : f32
    %11 = vector.broadcast %cst_7 : f32 to vector<8x128xf32>
    %12 = arith.maximumf %10, %11 : vector<8x128xf32>
    %13 = arith.truncf %12 : vector<8x128xf32> to vector<8x128xbf16>
    %c0_8 = arith.constant 0 : index
    %c0_9 = arith.constant 0 : index
    %c0_10 = arith.constant 0 : index
    %14 = vector.load %arg6[%c0_8, %c0_9, %c0_10] : memref<1x8x128xbf16, #tpu.memory_space<vmem>>, vector<1x8x128xbf16>
    %15 = vector.shape_cast %14 : vector<1x8x128xbf16> to vector<8x128xbf16>
    %16 = vector.shape_cast %13 : vector<8x128xbf16> to vector<1x8x128xbf16>
    tpu.vector_store %arg6[%c0_8, %c0_9, %c0_10], %16 {strides = array<i32>} : memref<1x8x128xbf16, #tpu.memory_space<vmem>>, vector<1x8x128xbf16>,
    %c0_i32 = arith.constant 0 : i32
    %17 = arith.cmpi eq, %arg2, %c0_i32 : i32
    %18 = arith.extui %17 : i1 to i32
    %c0_i32_11 = arith.constant 0 : i32
    %19 = arith.cmpi ne, %18, %c0_i32_11 : i32
    scf.if %19 {
      %cst_19 = arith.constant 0.000000e+00 : f32
      %34 = vector.broadcast %cst_19 : f32 to vector<8x1xf32>
      %c0_20 = arith.constant 0 : index
      %c0_21 = arith.constant 0 : index
      %35 = vector.load %arg8[%c0_20, %c0_21] : memref<8x1xf32, #tpu.memory_space<vmem>>, vector<8x1xf32>
      tpu.vector_store %arg8[%c0_20, %c0_21], %34 {strides = array<i32>} : memref<8x1xf32, #tpu.memory_space<vmem>>, vector<8x1xf32>,
      %cst_22 = arith.constant 0.000000e+00 : f32
      %36 = vector.broadcast %cst_22 : f32 to vector<8x1xf32>
      %c0_23 = arith.constant 0 : index
      %c0_24 = arith.constant 0 : index
      %37 = vector.load %arg9[%c0_23, %c0_24] : memref<8x1xf32, #tpu.memory_space<vmem>>, vector<8x1xf32>
      tpu.vector_store %arg9[%c0_23, %c0_24], %36 {strides = array<i32>} : memref<8x1xf32, #tpu.memory_space<vmem>>, vector<8x1xf32>,
    } else {
    }
    %c1_i32 = arith.constant 1 : i32
    %20 = arith.muli %arg1, %c1_i32 : i32
    %21 = arith.addi %20, %arg2 : i32
    %c128_i32 = arith.constant 128 : i32
    %22 = arith.muli %21, %c128_i32 : i32
    %c128_i32_12 = arith.constant 128 : i32
    %23 = arith.addi %22, %c128_i32_12 : i32
    %c16_i32 = arith.constant 16 : i32
    %24 = arith.cmpi sle, %23, %c16_i32 : i32
    %25 = arith.extui %24 : i1 to i32
    %c0_i32_13 = arith.constant 0 : i32
    %26 = arith.cmpi ne, %25, %c0_i32_13 : i32
    scf.if %26 {
      %c0_19 = arith.constant 0 : index
      %c0_20 = arith.constant 0 : index
      %34 = vector.load %arg8[%c0_19, %c0_20] : memref<8x1xf32, #tpu.memory_space<vmem>>, vector<8x1xf32>
      %cst_21 = arith.constant dense<0.000000e+00> : vector<8xf32>
      %35 = vector.multi_reduction <add>, %12, %cst_21 [1] : vector<8x128xf32> to vector<8xf32>
      %36 = vector.shape_cast %35 : vector<8xf32> to vector<8x1xf32>
      %37 = arith.addf %34, %36 : vector<8x1xf32>
      %c0_22 = arith.constant 0 : index
      %c0_23 = arith.constant 0 : index
      %38 = vector.load %arg8[%c0_22, %c0_23] : memref<8x1xf32, #tpu.memory_space<vmem>>, vector<8x1xf32>
      tpu.vector_store %arg8[%c0_22, %c0_23], %37 {strides = array<i32>} : memref<8x1xf32, #tpu.memory_space<vmem>>, vector<8x1xf32>,
      %c0_24 = arith.constant 0 : index
      %c0_25 = arith.constant 0 : index
      %39 = vector.load %arg9[%c0_24, %c0_25] : memref<8x1xf32, #tpu.memory_space<vmem>>, vector<8x1xf32>
      %40 = arith.mulf %12, %12 : vector<8x128xf32>
      %cst_26 = arith.constant dense<0.000000e+00> : vector<8xf32>
      %41 = vector.multi_reduction <add>, %40, %cst_26 [1] : vector<8x128xf32> to vector<8xf32>
      %42 = vector.shape_cast %41 : vector<8xf32> to vector<8x1xf32>
      %43 = arith.addf %39, %42 : vector<8x1xf32>
      %c0_27 = arith.constant 0 : index
      %c0_28 = arith.constant 0 : index
      %44 = vector.load %arg9[%c0_27, %c0_28] : memref<8x1xf32, #tpu.memory_space<vmem>>, vector<8x1xf32>
      tpu.vector_store %arg9[%c0_27, %c0_28], %43 {strides = array<i32>} : memref<8x1xf32, #tpu.memory_space<vmem>>, vector<8x1xf32>,
    } else {
    }
    %c128_i32_14 = arith.constant 128 : i32
    %27 = arith.addi %22, %c128_i32_14 : i32
    %c16_i32_15 = arith.constant 16 : i32
    %28 = arith.cmpi sgt, %27, %c16_i32_15 : i32
    %29 = arith.extui %28 : i1 to i32
    %c0_i32_16 = arith.constant 0 : i32
    %30 = arith.cmpi ne, %29, %c0_i32_16 : i32
    scf.if %30 {
      %34 = tpu.iota {dimensions = array<i32: 1>} : vector<8x128xi32>
      %35 = vector.broadcast %22 : i32 to vector<8x128xi32>
      %36 = arith.addi %35, %34 : vector<8x128xi32>
      %c16_i32_19 = arith.constant 16 : i32
      %37 = vector.broadcast %c16_i32_19 : i32 to vector<8x128xi32>
      %38 = arith.cmpi slt, %36, %37 : vector<8x128xi32>
      %cst_20 = arith.constant 0.000000e+00 : f32
      %39 = vector.broadcast %cst_20 : f32 to vector<8x128xf32>
      %40 = arith.select %38, %12, %39 : vector<8x128xi1>, vector<8x128xf32>
      %c0_21 = arith.constant 0 : index
      %c0_22 = arith.constant 0 : index
      %41 = vector.load %arg8[%c0_21, %c0_22] : memref<8x1xf32, #tpu.memory_space<vmem>>, vector<8x1xf32>
      %cst_23 = arith.constant dense<0.000000e+00> : vector<8xf32>
      %42 = vector.multi_reduction <add>, %40, %cst_23 [1] : vector<8x128xf32> to vector<8xf32>
      %43 = vector.shape_cast %42 : vector<8xf32> to vector<8x1xf32>
      %44 = arith.addf %41, %43 : vector<8x1xf32>
      %c0_24 = arith.constant 0 : index
      %c0_25 = arith.constant 0 : index
      %45 = vector.load %arg8[%c0_24, %c0_25] : memref<8x1xf32, #tpu.memory_space<vmem>>, vector<8x1xf32>
      tpu.vector_store %arg8[%c0_24, %c0_25], %44 {strides = array<i32>} : memref<8x1xf32, #tpu.memory_space<vmem>>, vector<8x1xf32>,
      %c0_26 = arith.constant 0 : index
      %c0_27 = arith.constant 0 : index
      %46 = vector.load %arg9[%c0_26, %c0_27] : memref<8x1xf32, #tpu.memory_space<vmem>>, vector<8x1xf32>
      %47 = arith.mulf %40, %40 : vector<8x128xf32>
      %cst_28 = arith.constant dense<0.000000e+00> : vector<8xf32>
      %48 = vector.multi_reduction <add>, %47, %cst_28 [1] : vector<8x128xf32> to vector<8xf32>
      %49 = vector.shape_cast %48 : vector<8xf32> to vector<8x1xf32>
      %50 = arith.addf %46, %49 : vector<8x1xf32>
      %c0_29 = arith.constant 0 : index
      %c0_30 = arith.constant 0 : index
      %51 = vector.load %arg9[%c0_29, %c0_30] : memref<8x1xf32, #tpu.memory_space<vmem>>, vector<8x1xf32>
      tpu.vector_store %arg9[%c0_29, %c0_30], %50 {strides = array<i32>} : memref<8x1xf32, #tpu.memory_space<vmem>>, vector<8x1xf32>,
    } else {
    }
    %c0_i32_17 = arith.constant 0 : i32
    %31 = arith.cmpi eq, %arg2, %c0_i32_17 : i32
    %32 = arith.extui %31 : i1 to i32
    %c0_i32_18 = arith.constant 0 : i32
    %33 = arith.cmpi ne, %32, %c0_i32_18 : i32
    scf.if %33 {
      %c0_19 = arith.constant 0 : index
      %c0_20 = arith.constant 0 : index
      %34 = vector.load %arg8[%c0_19, %c0_20] : memref<8x1xf32, #tpu.memory_space<vmem>>, vector<8x1xf32>
      %c0_21 = arith.constant 0 : index
      %c0_22 = arith.constant 0 : index
      %35 = vector.load %arg9[%c0_21, %c0_22] : memref<8x1xf32, #tpu.memory_space<vmem>>, vector<8x1xf32>
      %36 = tpu.concatenate %34, %35 in 1 : vector<8x1xf32>, vector<8x1xf32> -> vector<8x2xf32>
      %c0_23 = arith.constant 0 : index
      %c0_24 = arith.constant 0 : index
      %c0_25 = arith.constant 0 : index
      %c0_26 = arith.constant 0 : index
      %37 = vector.load %arg7[%c0_23, %c0_24, %c0_25, %c0_26] : memref<1x1x8x2xf32, #tpu.memory_space<vmem>>, vector<1x1x8x2xf32>
      %38 = vector.shape_cast %37 : vector<1x1x8x2xf32> to vector<8x2xf32>
      %39 = vector.shape_cast %36 : vector<8x2xf32> to vector<1x1x8x2xf32>
      tpu.vector_store %arg7[%c0_23, %c0_24, %c0_25, %c0_26], %39 {strides = array<i32>} : memref<1x1x8x2xf32, #tpu.memory_space<vmem>>, vector<1x1x8x2xf32>,
    } else {
    }
    return
  }
  func.func @transform_0(%arg0: i32, %arg1: i32, %arg2: i32) -> (i32, i32, i32, i32) {
    %c1_i32 = arith.constant 1 : i32
    %0 = arith.muli %arg1, %c1_i32 : i32
    %1 = arith.addi %0, %arg2 : i32
    %c0_i32 = arith.constant 0 : i32
    %c0_i32_0 = arith.constant 0 : i32
    %c0_i32_1 = arith.constant 0 : i32
    return %arg0, %1, %c0_i32, %c0_i32_0 : i32, i32, i32, i32
  }
  func.func @transform_1(%arg0: i32, %arg1: i32, %arg2: i32) -> (i32, i32) {
    %c0_i32 = arith.constant 0 : i32
    %c0_i32_0 = arith.constant 0 : i32
    %c0_i32_1 = arith.constant 0 : i32
    return %c0_i32, %c0_i32_0 : i32, i32
  }
  func.func @transform_2(%arg0: i32, %arg1: i32, %arg2: i32) -> (i32, i32) {
    %c0_i32 = arith.constant 0 : i32
    %c0_i32_0 = arith.constant 0 : i32
    %c0_i32_1 = arith.constant 0 : i32
    return %c0_i32, %c0_i32_0 : i32, i32
  }
  func.func @transform_3(%arg0: i32, %arg1: i32, %arg2: i32) -> (i32, i32, i32) {
    %c1_i32 = arith.constant 1 : i32
    %0 = arith.muli %arg1, %c1_i32 : i32
    %1 = arith.addi %0, %arg2 : i32
    %c0_i32 = arith.constant 0 : i32
    %c0_i32_0 = arith.constant 0 : i32
    return %arg0, %c0_i32, %1 : i32, i32, i32
  }
  func.func @transform_4(%arg0: i32, %arg1: i32, %arg2: i32) -> (i32, i32, i32, i32) {
    %c0_i32 = arith.constant 0 : i32
    %c0_i32_0 = arith.constant 0 : i32
    %c0_i32_1 = arith.constant 0 : i32
    return %arg0, %arg1, %c0_i32, %c0_i32_0 : i32, i32, i32, i32
  }
}

</mosaic_0001>

<llo_original>
// kernel: tpu_custom_call.1
$region0: #{tpu_custom_call.1}
  #allocation0 [shape = 'u32[]', space=smem, size = 0x4, offset = 0x4, fixed_abs, tag = 'smem constant byte address 0x4 - core index']
  #allocation1 [shape = 'u32[144,128]{1,0:T(1,128)}', space=vmem, size = 0x12000, scoped, tag = 'internal scratch']
  #allocation2 [shape = 'f32[8,1]{1,0:T(8,128)}', space=vmem, size = 0x1000, scoped, tag = 'scratch operand']
  #allocation3 [shape = 'f32[8,1]{1,0:T(8,128)}', space=vmem, size = 0x1000, scoped, tag = 'scratch operand']
  %s0 = inlined_call_operand.hbm [shape: bf16[2,1,8,256], index: 0, kind: input, shape index: {}]
  %s1 = inlined_call_operand.vmem [shape: bf16[8,24], index: 1, kind: input, shape index: {}]
  %s2 = inlined_call_operand.vmem [shape: f32[8,1], index: 2, kind: input, shape index: {}]
  %s3 = inlined_call_operand.hbm [shape: bf16[2,8,128], index: 3, kind: output, shape index: {0}]
  %s4 = inlined_call_operand.vmem [shape: f32[2,1,8,2], index: 4, kind: output, shape index: {1}]
  %5 = xla_tuple %s3, %s4
  %s6 = sld [smem:[#allocation0]]
  $region73: #{tpu_custom_call.1} parent=0
    _
  %s8 = ssub.s32 1, %s6
  %s9 = scalar_select 0, %s8, %s6
  $region1: #{tpu_custom_call.1} parent=0
    #allocation4 [shape = 'u8[8192]{0}', space=vmem, size = 0x2000, scoped, tag = 'input window, operand 0']
    #allocation5 [shape = 's32[2]{0}', space=sflag, size = 0x8, scoped, tag = 'scoped memory for tpu_custom_call.1']
    #allocation6 [shape = 's32[2]{0}', space=sflag, size = 0x8, scoped, tag = 'scoped memory for tpu_custom_call.1']
    #allocation7 [shape = 'u8[4096]{0}', space=vmem, size = 0x1000, scoped, tag = 'output window, operand 0']
    %10 = vsyncpa [#allocation5], 0
    %s11 = scalar_lea.sflag [#allocation5], 1
    %12 = vsyncpa %s11, 0
    %13 = vsyncpa [#allocation6], 0
    %s14 = scalar_lea.sflag [#allocation6], 1
    %15 = vsyncpa %s14, 0
    loop: start=0, step=1, limit=4
    $region2: #{tpu_custom_call.1} parent=1 // loop_pre_header
      _
    $region3: #{tpu_custom_call.1} parent=1 // loop_header
      %s17 = sphi 0, %s21
      %p18 = scmp.ge.s32.totalorder %s17, 4
      %s24 = sphi 0, %s43
      %s25 = sphi 0, %s39
      %s26 = sphi 0, %s35
      %s27 = sphi 0, %s24
      %s28 = sphi 0, %s25
      %s29 = sphi 0, %s26
      %s30 = sphi 0, %s27
      %s31 = sphi 0, %s28
      %s32 = sphi 0, %s29
      %s50 = sphi 0, %s52
      %s53 = sphi 0, %s50
      %s54 = sphi 0, %s53
      %s70 = sphi 0, %s54
      %s74 = sphi 0, %s74
      %s76 = sphi 0, %s74
      %s77 = sphi 0, %s76
      %s91 = sphi 0, %s77
      %s95 = sphi 0, %s95
      %s97 = sphi 0, %s95
      %s98 = sphi 0, %s97
      %s112 = sphi 0, %s98
      %s122 = sphi 0, %s124
      %s125 = sphi 0, %s122
      %s126 = sphi 0, %s125
      %s142 = sphi 0, %s126
      %s150 = sphi 0, %s152
      %s153 = sphi 0, %s150
      %s154 = sphi 0, %s153
      %s170 = sphi 0, %s154
    $region4: #{tpu_custom_call.1} parent=1 // loop_header_branch
      %20 = sbr.rel (%p18) target = $region8
    $region5: #{tpu_custom_call.1} parent=1 // loop_body
      %s22 = ssub.s32 %s17, 1
      %s23 = ssub.s32 %s17, 2
      %s33 = sadd.s32 1, %s26
      %p34 = scmp.ge.s32.totalorder %s33, 1
      %s35 = scalar_select %p34, 0, %s33
      %s36 = sadd.s32 1, %s25
      %s37 = scalar_select %p34, %s36, %s25
      %p38 = scmp.ge.s32.totalorder %s37, 1
      %s39 = scalar_select %p38, 0, %s37
      %s40 = sadd.s32 1, %s24
      %s41 = scalar_select %p38, %s40, %s24
      %p42 = scmp.ge.s32.totalorder %s41, 2
      %s43 = scalar_select %p42, 0, %s41
      %s44 = sadd.s32 %s25, %s26
      %s45 = sadd.s32 %s39, %s35
      %s46 = ssub.s32 %s24, %s43
      %s47 = ssub.s32 %s44, %s45
      %s48 = sor.u32 %s46, %s47
      %p49 = scmp.eq.s32.totalorder %s48, 0
      %s51 = sadd.s32 %s50, 1
      %s52 = scalar_select %p49, %s50, %s51
      %p55 = pneg %p49
      %p56 = scmp.eq.s32.totalorder %s17, 1
      %p57 = por %p55, %p56
      %p58 = scmp.ne.s32.totalorder %s50, %s53
      %p59 = scmp.eq.s32.totalorder %s17, 0
      %p60 = por %p58, %p59
      %p61 = scmp.ne.s32.totalorder %s50, %s53
      %p62 = scmp.eq.s32.totalorder %s22, 1
      %p63 = por %p61, %p62
      %p64 = scmp.ne.s32.totalorder %s53, %s54
      %p65 = scmp.eq.s32.totalorder %s22, 0
      %p66 = por %p64, %p65
      %p67 = scmp.ne.s32.totalorder %s53, %s54
      %p68 = scmp.eq.s32.totalorder %s23, 1
      %p69 = por %p67, %p68
      %p71 = scmp.ne.s32.totalorder %s54, %s70
      %p72 = scmp.eq.s32.totalorder %s23, 0
      %p73 = por %p71, %p72
      %s75 = sadd.s32 %s74, 1
      %p78 = scmp.eq.s32.totalorder %s17, 1
      %p79 = scmp.ne.s32.totalorder %s74, %s76
      %p80 = scmp.eq.s32.totalorder %s17, 0
      %p81 = por %p79, %p80
      %p82 = scmp.ne.s32.totalorder %s74, %s76
      %p83 = scmp.eq.s32.totalorder %s22, 1
      %p84 = por %p82, %p83
      %p85 = scmp.ne.s32.totalorder %s76, %s77
      %p86 = scmp.eq.s32.totalorder %s22, 0
      %p87 = por %p85, %p86
      %p88 = scmp.ne.s32.totalorder %s76, %s77
      %p89 = scmp.eq.s32.totalorder %s23, 1
      %p90 = por %p88, %p89
      %p92 = scmp.ne.s32.totalorder %s77, %s91
      %p93 = scmp.eq.s32.totalorder %s23, 0
      %p94 = por %p92, %p93
      %s96 = sadd.s32 %s95, 1
      %p99 = scmp.eq.s32.totalorder %s17, 1
      %p100 = scmp.ne.s32.totalorder %s95, %s97
      %p101 = scmp.eq.s32.totalorder %s17, 0
      %p102 = por %p100, %p101
      %p103 = scmp.ne.s32.totalorder %s95, %s97
      %p104 = scmp.eq.s32.totalorder %s22, 1
      %p105 = por %p103, %p104
      %p106 = scmp.ne.s32.totalorder %s97, %s98
      %p107 = scmp.eq.s32.totalorder %s22, 0
      %p108 = por %p106, %p107
      %p109 = scmp.ne.s32.totalorder %s97, %s98
      %p110 = scmp.eq.s32.totalorder %s23, 1
      %p111 = por %p109, %p110
      %p113 = scmp.ne.s32.totalorder %s98, %s112
      %p114 = scmp.eq.s32.totalorder %s23, 0
      %p115 = por %p113, %p114
      %s116 = sadd.s32 %s25, %s26
      %s117 = sadd.s32 %s39, %s35
      %s118 = ssub.s32 %s24, %s43
      %s119 = ssub.s32 %s116, %s117
      %s120 = sor.u32 %s118, %s119
      %p121 = scmp.eq.s32.totalorder %s120, 0
      %s123 = sadd.s32 %s122, 1
      %s124 = scalar_select %p121, %s122, %s123
      %p127 = pneg %p121
      %p128 = scmp.eq.s32.totalorder %s17, 1
      %p129 = por %p127, %p128
      %p130 = scmp.ne.s32.totalorder %s122, %s125
      %p131 = scmp.eq.s32.totalorder %s17, 0
      %p132 = por %p130, %p131
      %p133 = scmp.ne.s32.totalorder %s122, %s125
      %p134 = scmp.eq.s32.totalorder %s22, 1
      %p135 = por %p133, %p134
      %p136 = scmp.ne.s32.totalorder %s125, %s126
      %p137 = scmp.eq.s32.totalorder %s22, 0
      %p138 = por %p136, %p137
      %p139 = scmp.ne.s32.totalorder %s125, %s126
      %p140 = scmp.eq.s32.totalorder %s23, 1
      %p141 = por %p139, %p140
      %p143 = scmp.ne.s32.totalorder %s126, %s142
      %p144 = scmp.eq.s32.totalorder %s23, 0
      %p145 = por %p143, %p144
      %s146 = ssub.s32 %s24, %s43
      %s147 = ssub.s32 %s25, %s39
      %s148 = sor.u32 %s146, %s147
      %p149 = scmp.eq.s32.totalorder %s148, 0
      %s151 = sadd.s32 %s150, 1
      %s152 = scalar_select %p149, %s150, %s151
      %p155 = pneg %p149
      %p156 = scmp.eq.s32.totalorder %s17, 1
      %p157 = por %p155, %p156
      %p158 = scmp.ne.s32.totalorder %s150, %s153
      %p159 = scmp.eq.s32.totalorder %s17, 0
      %p160 = por %p158, %p159
      %p161 = scmp.ne.s32.totalorder %s150, %s153
      %p162 = scmp.eq.s32.totalorder %s22, 1
      %p163 = por %p161, %p162
      %p164 = scmp.ne.s32.totalorder %s153, %s154
      %p165 = scmp.eq.s32.totalorder %s22, 0
      %p166 = por %p164, %p165
      %p167 = scmp.ne.s32.totalorder %s153, %s154
      %p168 = scmp.eq.s32.totalorder %s23, 1
      %p169 = por %p167, %p168
      %p171 = scmp.ne.s32.totalorder %s154, %s170
      %p172 = scmp.eq.s32.totalorder %s23, 0
      %p173 = por %p171, %p172
      %p174 = scmp.le.s32.totalorder 1, %s17
      %p175 = scmp.lt.s32.totalorder %s17, 3
      %p176 = pnand %p174, %p175
      %p177 = pneg %p176
      // Predicated region
      $region9: #{tpu_custom_call.1} parent=5 // pred_check
        _
      $region10: #{tpu_custom_call.1} parent=5 // pred_check_branch
        %179 = sbr.rel (%p176) target = $region12
      $region11: #{tpu_custom_call.1} parent=5 // pred_region
        %s180 = ssub.s32 %s17, 1
        // Predicated region
        $region13: #{tpu_custom_call.1} parent=11 // pred_check
          %p181 = pneg %p87
        $region14: #{tpu_custom_call.1} parent=11 // pred_check_branch
          %183 = sbr.rel (%p181) target = $region16
        $region15: #{tpu_custom_call.1} parent=11 // pred_region
          _
        $region16: #{tpu_custom_call.1} parent=11 // pred_fallthru
          _
        // Predicated region
        $region17: #{tpu_custom_call.1} parent=11 // pred_check
          %p184 = pneg %p108
        $region18: #{tpu_custom_call.1} parent=11 // pred_check_branch
          %186 = sbr.rel (%p184) target = $region20
        $region19: #{tpu_custom_call.1} parent=11 // pred_region
          _
        $region20: #{tpu_custom_call.1} parent=11 // pred_fallthru
          _
      $region12: #{tpu_custom_call.1} parent=5 // pred_fallthru
        _
      %p187 = scmp.lt.s32.totalorder %s17, 2
      // Predicated region
      $region21: #{tpu_custom_call.1} parent=5 // pred_check
        %p188 = pneg %p187
      $region22: #{tpu_custom_call.1} parent=5 // pred_check_branch
        %190 = sbr.rel (%p188) target = $region24
      $region23: #{tpu_custom_call.1} parent=5 // pred_region
        // Predicated region
        $region25: #{tpu_custom_call.1} parent=23 // pred_check
          %p191 = pneg %p60
        $region26: #{tpu_custom_call.1} parent=23 // pred_check_branch
          %193 = sbr.rel (%p191) target = $region28
        $region27: #{tpu_custom_call.1} parent=23 // pred_region
          %s194 = sand.u32 %s50, 1
          %s195 = scalar_lea.sflag [#allocation5], %s194
          %s196 = sand.u32 %s50, 1
          %s197 = smul.addr %s196, 8
          %s198 = scalar_lea.vmem [#allocation4], %s197
          %s199 = sadd.s32 %s25, %s26
          %s201 = ssub.s32 128, 128
          %202 = vsyncadd %s195, %s201
          %s203 = smul.addr %s199, 2
          %s204 = smul.addr %s24, 2
          %s205 = sadd.s32 %s203, %s204
          %s206 = smul.addr %s205, 64
          %s207 = scalar_lea.hbm %s0, %s206
          %s209 = sshll.u32 %s198, 4
          %s210 = int_to_ptr.vmem [resolvable:$true] %s209
          %212 = dma.hbm_to_vmem [thread:$0]  %s207, 128, %s210, %s195
        $region28: #{tpu_custom_call.1} parent=23 // pred_fallthru
          _
      $region24: #{tpu_custom_call.1} parent=5 // pred_fallthru
        _
      %p213 = scmp.le.s32.totalorder 1, %s17
      %p214 = scmp.lt.s32.totalorder %s17, 3
      %p215 = pnand %p213, %p214
      %p216 = pneg %p215
      // Predicated region
      $region29: #{tpu_custom_call.1} parent=5 // pred_check
        _
      $region30: #{tpu_custom_call.1} parent=5 // pred_check_branch
        %218 = sbr.rel (%p215) target = $region32
      $region31: #{tpu_custom_call.1} parent=5 // pred_region
        %s219 = ssub.s32 %s17, 1
        %s220 = sand.u32 %s53, 1
        %s221 = scalar_lea.sflag [#allocation5], %s220
        %s222 = sand.u32 %s53, 1
        %s223 = smul.addr %s222, 8
        %s224 = scalar_lea.vmem [#allocation4], %s223
        // Predicated region
        $region33: #{tpu_custom_call.1} parent=31 // pred_check
          %p225 = pneg %p66
        $region34: #{tpu_custom_call.1} parent=31 // pred_check_branch
          %227 = sbr.rel (%p225) target = $region36
        $region35: #{tpu_custom_call.1} parent=31 // pred_region
          %228 = dma.done %s221, 128
        $region36: #{tpu_custom_call.1} parent=31 // pred_fallthru
          _
        %s229 = sand.u32 %s53, 1
        %s230 = scalar_lea.sflag [#allocation5], %s229
        %s231 = sand.u32 %s53, 1
        %s232 = smul.addr %s231, 8
        %s233 = scalar_lea.vmem [#allocation4], %s232
        %p234 = pneg %p66
        %p235 = pneg %p63
        %p236 = pneg %p87
        %p237 = pneg %p84
        %p238 = pneg %p108
        %p239 = pneg %p105
        %p240 = pneg %p138
        %p241 = pneg %p135
        %s242 = sand.u32 %s125, 1
        %s243 = scalar_lea.sflag [#allocation6], %s242
        %s244 = sand.u32 %s125, 1
        %s245 = smul.addr %s244, 4
        %s246 = scalar_lea.vmem [#allocation7], %s245
        %p247 = pneg %p166
        %p248 = pneg %p163
        %p249 = scmp.lt.s32.totalorder %s27, 1
        %s250 = scalar_select %p249, %s27, 1
        %p251 = scmp.lt.s32.totalorder %s28, 0
        %s252 = scalar_select %p251, %s28, 0
        %s253 = sadd.s32 %s252, %s250
        %s254 = smul.addr %s253, 8
        %s255 = scalar_lea.vmem %s4, %s254
        %s256 = sadd.s32 %s28, %s29
        %s257 = sadd.s32 %s28, %s29
        %p258 = scmp.lt.s32.totalorder %s27, 1
        %s259 = scalar_select %p258, %s27, 1
        %p260 = scmp.lt.s32.totalorder %s28, 0
        %s261 = scalar_select %p260, %s28, 0
        %s262 = sadd.s32 %s261, %s259
        %s263 = smul.addr %s262, 8
        %s264 = scalar_lea.vmem %s4, %s263
        %v266 = vld [vmem:[%s224] sm:$0xff]
        %v268 = vunpack.c.l.b16 %v266
        %v269 = vunpack.c.h.b16 %v266
        %v270 = vpack.c.b16 %v268, %v268
        %v271 = vpack.c.b16 %v269, %v269
        %272 = vrot.lane.b32.xlu0 %v270, 126
        %v273 = vpop.permute.xlu0 %272
        %274 = vrot.lane.b32.xlu0 %v271, 126
        %v275 = vpop.permute.xlu0 %274
        %vm276 = vcmask 1031168
        %v277 = vsel %vm276, %v273, %v275
        %278 = vrot.lane.b32.xlu0 %v270, 124
        %v279 = vpop.permute.xlu0 %278
        %280 = vrot.lane.b32.xlu0 %v271, 124
        %v281 = vpop.permute.xlu0 %280
        %vm282 = vcmask 1014784
        %v283 = vsel %vm282, %v279, %v281
        %vm284 = vcmask 1043456
        %v287 = vsel %vm284, %v266, %v277
        %v289 = vld [vmem:[%s1] sm:$0xf]
        %v290 = vld [vmem:[%s2] sm:$0xff]
        %292 = vset.pattern.permute.xlu0 0
        %293 = vperm.xlu0 %292, %v290
        %v294 = vpop.permute.xlu0 %293
        %vm296 = vcmask 195584
        %v298 = vsel %vm296, %v289, 0
        %v301 = vsel %vm284, %v283, 0
        %303 = vmatprep.subr.bf16.mxu0 0
        %304 = vmatpush1.bf16.msra.mxu0 %v287
        %305 = vmatprep.subr.bf16.mxu0 0
        %306 = vmatpush1.bf16.msra.mxu0 %v301
        %307 = vmatprep.subr.bf16.mxu0 0
        %308 = vmatpush1.bf16.msra.mxu0 0
        %309 = vmatprep.subr.bf16.mxu0 0
        %310 = vmatpush1.bf16.msra.mxu0 0
        %311 = vmatprep.subr.bf16.mxu0 0
        %312 = vmatpush1.bf16.msra.mxu0 0
        %313 = vmatprep.subr.bf16.mxu0 0
        %314 = vmatpush1.bf16.msra.mxu0 0
        %315 = vmatprep.subr.bf16.mxu0 0
        %316 = vmatpush1.bf16.msra.mxu0 0
        %317 = vmatprep.subr.bf16.mxu0 0
        %318 = vmatpush1.bf16.msra.mxu0 0
        %319 = vmatprep.subr.bf16.mxu0 0
        %320 = vmatpush1.bf16.msra.mxu0 0
        %321 = vmatprep.subr.bf16.mxu0 0
        %322 = vmatpush1.bf16.msra.mxu0 0
        %323 = vmatprep.subr.bf16.mxu0 0
        %324 = vmatpush1.bf16.msra.mxu0 0
        %325 = vmatprep.subr.bf16.mxu0 0
        %326 = vmatpush1.bf16.msra.mxu0 0
        %327 = vmatprep.subr.bf16.mxu0 0
        %328 = vmatpush1.bf16.msra.mxu0 0
        %329 = vmatprep.subr.bf16.mxu0 0
        %330 = vmatpush1.bf16.msra.mxu0 0
        %331 = vmatprep.subr.bf16.mxu0 0
        %332 = vmatpush1.bf16.msra.mxu0 0
        %333 = vmatprep.subr.bf16.mxu0 0
        %334 = vmatpush1.bf16.msra.mxu0 0
        %335 = vmatprep.mubr.bf16.mxu0 0
        %336 = vmatmul.mubr.bf16.gmra.mrb[0].mxu0 %v298
        %v337 = vpop.f32.mrb[0].mxu0
        %v338 = vadd.f32 %v294, %v337
        %v339 = vpop.f32.mrb[0].mxu0
        %v340 = vpop.f32.mrb[0].mxu0
        %v341 = vpop.f32.mrb[0].mxu0
        %342 = vdwg.mxu0
        %v343 = vmax.f32 %v338, 0.0
        %v344 = vpack.c.bf16 %v343, %v343
        %345 = vst [vmem:[%s246] sm:$0xf] %v344
        %p346 = scmp.eq.s32.totalorder %s29, 0
        // Predicated region
        $region37: #{tpu_custom_call.1} parent=31 // pred_check
          %p347 = pneg %p346
        $region38: #{tpu_custom_call.1} parent=31 // pred_check_branch
          %349 = sbr.rel (%p347) target = $region40
        $region39: #{tpu_custom_call.1} parent=31 // pred_region
          %vm350 = vcmask 7168
          %351 = vst.msk [vmem:[#allocation2] sm:$0xff] %vm350, 0.0
          %352 = vst.msk [vmem:[#allocation3] sm:$0xff] %vm350, 0.0
        $region40: #{tpu_custom_call.1} parent=31 // pred_fallthru
          _
        %s353 = sadd.s32 %s28, %s29
        %s354 = smul.u32 %s353, 128
        %s355 = sadd.s32 %s354, 128
        %p356 = scmp.le.s32.totalorder %s355, 16
        // Predicated region
        $region41: #{tpu_custom_call.1} parent=31 // pred_check
          %p357 = pneg %p356
        $region42: #{tpu_custom_call.1} parent=31 // pred_check_branch
          %359 = sbr.rel (%p357) target = $region44
        $region43: #{tpu_custom_call.1} parent=31 // pred_region
          %v360 = vld [vmem:[#allocation2] sm:$0xff]
          %361 = vadd.xlane.f32.xlu0 %v343
          %v362 = vpop.xlane.xlu0 %361
          %v363 = vadd.f32 %v360, %v362
          %vm364 = vcmask 7168
          %365 = vst.msk [vmem:[#allocation2] sm:$0xff] %vm364, %v363
          %v366 = vld [vmem:[#allocation3] sm:$0xff]
          %v367 = vmul.f32 %v343, %v343
          %368 = vadd.xlane.f32.xlu0 %v367
          %v369 = vpop.xlane.xlu0 %368
          %v370 = vadd.f32 %v366, %v369
          %371 = vst.msk [vmem:[#allocation3] sm:$0xff] %vm364, %v370
        $region44: #{tpu_custom_call.1} parent=31 // pred_fallthru
          _
        %p372 = scmp.gt.s32.totalorder %s355, 16
        // Predicated region
        $region45: #{tpu_custom_call.1} parent=31 // pred_check
          %p373 = pneg %p372
        $region46: #{tpu_custom_call.1} parent=31 // pred_check_branch
          %375 = sbr.rel (%p373) target = $region48
        $region47: #{tpu_custom_call.1} parent=31 // pred_region
          %v376 = vlaneseq
          %v377 = vand.u32 %v376, 127
          %v378 = vstv %s354
          %v379 = vadd.s32 %v378, %v377
          %vm380 = vcmp.lt.s32.totalorder %v379, 16
          %v381 = vsel %vm380, %v343, 0.0
          %v382 = vld [vmem:[#allocation2] sm:$0xff]
          %383 = vadd.xlane.f32.xlu0 %v381
          %v384 = vpop.xlane.xlu0 %383
          %v385 = vadd.f32 %v382, %v384
          %vm386 = vcmask 7168
          %387 = vst.msk [vmem:[#allocation2] sm:$0xff] %vm386, %v385
          %v388 = vld [vmem:[#allocation3] sm:$0xff]
          %v389 = vmul.f32 %v381, %v381
          %390 = vadd.xlane.f32.xlu0 %v389
          %v391 = vpop.xlane.xlu0 %390
          %v392 = vadd.f32 %v388, %v391
          %393 = vst.msk [vmem:[#allocation3] sm:$0xff] %vm386, %v392
        $region48: #{tpu_custom_call.1} parent=31 // pred_fallthru
          _
        // Predicated region
        $region49: #{tpu_custom_call.1} parent=31 // pred_check
          %p394 = pneg %p346
        $region50: #{tpu_custom_call.1} parent=31 // pred_check_branch
          %396 = sbr.rel (%p394) target = $region52
        $region51: #{tpu_custom_call.1} parent=31 // pred_region
          %v397 = vld [vmem:[#allocation2] sm:$0xff]
          %v398 = vld [vmem:[#allocation3] sm:$0xff]
          %400 = vrot.lane.b32.xlu0 %v398, 1
          %v401 = vpop.permute.xlu0 %400
          %vm403 = vcmask 7168
          %v404 = vsel %vm403, %v397, %v401
          %vm405 = vcmask 15360
          %406 = vst.msk [vmem:[%s264] sm:$0xff] %vm405, %v404
        $region52: #{tpu_custom_call.1} parent=31 // pred_fallthru
          _
        %s407 = sand.u32 %s125, 1
        %s408 = scalar_lea.sflag [#allocation6], %s407
        %s409 = sand.u32 %s125, 1
        %s410 = smul.addr %s409, 4
        %s411 = scalar_lea.vmem [#allocation7], %s410
        %p412 = scmp.lt.s32.totalorder %s27, 1
        %s413 = scalar_select %p412, %s27, 1
        %p414 = scmp.lt.s32.totalorder %s28, 0
        %s415 = scalar_select %p414, %s28, 0
        %s416 = sadd.s32 %s415, %s413
        %s417 = smul.addr %s416, 8
        %s418 = scalar_lea.vmem %s4, %s417
        // Predicated region
        $region53: #{tpu_custom_call.1} parent=31 // pred_check
          %p419 = pneg %p135
        $region54: #{tpu_custom_call.1} parent=31 // pred_check_branch
          %421 = sbr.rel (%p419) target = $region56
        $region55: #{tpu_custom_call.1} parent=31 // pred_region
          %s422 = sadd.s32 %s28, %s29
          %s424 = ssub.s32 64, 64
          %425 = vsyncadd %s408, %s424
          %s426 = sadd.s32 %s422, %s27
          %s427 = smul.addr %s426, 64
          %s428 = scalar_lea.hbm %s3, %s427
          %s430 = sshll.u32 %s411, 4
          %s431 = int_to_ptr.vmem [resolvable:$true] %s430
          %433 = dma.vmem_to_hbm [thread:$0]  %s431, 64, %s428, %s408
        $region56: #{tpu_custom_call.1} parent=31 // pred_fallthru
          _
        // Predicated region
        $region57: #{tpu_custom_call.1} parent=31 // pred_check
          %p434 = pneg %p163
        $region58: #{tpu_custom_call.1} parent=31 // pred_check_branch
          %436 = sbr.rel (%p434) target = $region60
        $region59: #{tpu_custom_call.1} parent=31 // pred_region
          _
        $region60: #{tpu_custom_call.1} parent=31 // pred_fallthru
          _
      $region32: #{tpu_custom_call.1} parent=5 // pred_fallthru
        _
      %p437 = scmp.le.s32.totalorder 2, %s17
      // Predicated region
      $region61: #{tpu_custom_call.1} parent=5 // pred_check
        %p438 = pneg %p437
      $region62: #{tpu_custom_call.1} parent=5 // pred_check_branch
        %440 = sbr.rel (%p438) target = $region64
      $region63: #{tpu_custom_call.1} parent=5 // pred_region
        %s441 = ssub.s32 %s17, 2
        // Predicated region
        $region65: #{tpu_custom_call.1} parent=63 // pred_check
          %p442 = pneg %p141
        $region66: #{tpu_custom_call.1} parent=63 // pred_check_branch
          %444 = sbr.rel (%p442) target = $region68
        $region67: #{tpu_custom_call.1} parent=63 // pred_region
          %s445 = sand.u32 %s126, 1
          %s446 = scalar_lea.sflag [#allocation6], %s445
          %s447 = sand.u32 %s126, 1
          %s448 = smul.addr %s447, 4
          %s449 = scalar_lea.vmem [#allocation7], %s448
          %450 = dma.done %s446, 64
        $region68: #{tpu_custom_call.1} parent=63 // pred_fallthru
          _
        // Predicated region
        $region69: #{tpu_custom_call.1} parent=63 // pred_check
          %p451 = pneg %p169
        $region70: #{tpu_custom_call.1} parent=63 // pred_check_branch
          %453 = sbr.rel (%p451) target = $region72
        $region71: #{tpu_custom_call.1} parent=63 // pred_region
          %p454 = scmp.lt.s32.totalorder %s30, 1
          %s455 = scalar_select %p454, %s30, 1
          %p456 = scmp.lt.s32.totalorder %s31, 0
          %s457 = scalar_select %p456, %s31, 0
          %s458 = sadd.s32 %s457, %s455
          %s459 = smul.addr %s458, 8
          %s460 = scalar_lea.vmem %s4, %s459
        $region72: #{tpu_custom_call.1} parent=63 // pred_fallthru
          _
      $region64: #{tpu_custom_call.1} parent=5 // pred_fallthru
        _
    $region6: #{tpu_custom_call.1} parent=1 // loop_footer
      %s21 = sadd.s32 1, %s17
    $region7: #{tpu_custom_call.1} parent=1 // loop_footer_branch
      %16 = sbr.rel target = $region3
    $region8: #{tpu_custom_call.1} parent=1 // loop_exit
      _
    %461 = vsyncpa [#allocation5], 1
    %s462 = scalar_lea.sflag [#allocation5], 1
    %463 = vsyncpa %s462, 1
    %464 = vsyncpa [#allocation6], 1
    %s465 = scalar_lea.sflag [#allocation6], 1
    %466 = vsyncpa %s465, 1

</llo_original>
